<compile_context>
chip_gen: v5e
topology: v5e:2x2
jax: 0.10.0
libtpu: 0.0.40
codegen_flags: <defaults>
</compile_context>

<pallas_src>
import jax
import jax.numpy as jnp
from jax.experimental import pallas as pl
from jax.experimental.pallas import tpu as pltpu


# ----------------------------- Pallas kernel -------------------------------------------


def _fused_ae_kernel(
    x_ref,                                  # (TB, N, Cin)  f32
    w1, b1,                                 # (Cin, 64) f32, (1, 64) f32  (VPU layer)
    w2, b2, w3, b3, w4, b4,                 # bf16 weights, f32 biases    (encoder MXU layers)
    dw1, db1, dw2, db2, dw3, db3,           # bf16 weights, f32 biases    (decoder)
    lat_ref,                                # (TB, latent)            f32
    rec_ref,                                # (TB, n_points*out_dims) f32
):
    TB, N, Cin = x_ref.shape
    latent = lat_ref.shape[-1]

    xf = x_ref[...].reshape(TB * N, Cin)    # fold the batch tile into the matmul M dim

    # ---- encoder layer 1: K = Cin (3) -> broadcast MACs on the VPU (skip the MXU).
    w1v = w1[...]                           # (Cin, 64) f32
    e = xf[:, 0:1] * w1v[0:1, :]
    for i in range(1, Cin):
        e = e + xf[:, i:i + 1] * w1v[i:i + 1, :]
    e = jnp.maximum(e + b1[...], 0.0)       # (TB*N, 64) f32

    # ---- MXU layers: bf16 operands, f32 accumulation, bias+ReLU in f32.
    def mm_relu(a, w_ref, b_ref):
        w = w_ref[...]
        acc = jnp.dot(a.astype(w.dtype), w, preferred_element_type=jnp.float32)
        return jnp.maximum(acc + b_ref[...], 0.0)

    e = mm_relu(e, w2, b2)                  # (TB*N, 64)
    e = mm_relu(e, w3, b3)                  # (TB*N, 64)
    e = mm_relu(e, w4, b4)                  # (TB*N, latent)

    # ---- global max-pool over points (== torch.max(e, 2)[0]); latent stays in VMEM.
    lat = jnp.max(e.reshape(TB, N, latent), axis=1)     # (TB, latent) f32
    lat_ref[...] = lat

    # ---- decoder: fc1+ReLU, fc2+ReLU, fc3 (BN folded).
    h = mm_relu(lat, dw1, db1)
    h = mm_relu(h, dw2, db2)
    dw3v = dw3[...]
    rec_ref[...] = (
        jnp.dot(h.astype(dw3v.dtype), dw3v, preferred_element_type=jnp.float32) + db3[...]
    )


# ----------------------------- wrapper --------------------------------------------------


def _rep_spec(arr):
    # full-array block, replicated (constant index map) across the batch grid
    nd = arr.ndim
    return pl.BlockSpec(arr.shape, lambda b, _nd=nd: (0,) * _nd)


def pointnet_ae_forward(x, enc_params, dec_params, n_points, out_dims,
                        compute_dtype=jnp.bfloat16):
    """x: (B, N, in_dims) f32 -> (recon (B, N, out_dims), latent (B, latent))."""
    B, N, Cin = x.shape
    latent_dim = enc_params[6].shape[1]     # w4 out-features

    # Batch tile: whole batch if small, else 8 elements per step (keeps the (8,128)
    # sublane constraint satisfied and amortizes the per-step overhead).
    TB = B if (B <= 8 or B % 8 != 0) else 8
    assert B % TB == 0

    # bf16 operands for the MXU layers; layer-1 weight (VPU path) and biases stay f32.
    w1, b1, w2, b2, w3, b3, w4, b4 = enc_params
    dw1, db1, dw2, db2, dw3, db3 = dec_params
    cast = lambda w: w.astype(compute_dtype)
    params = (w1, b1, cast(w2), b2, cast(w3), b3, cast(w4), b4,
              cast(dw1), db1, cast(dw2), db2, cast(dw3), db3)

    flops = (2 * B * N * (Cin * 64 + 64 * 64 + 64 * 64 + 64 * latent_dim)
             + 2 * B * (latent_dim * (n_points // 2)
                        + (n_points // 2) * n_points
                        + n_points * 3 * n_points))
    bytes_accessed = (x.size * x.dtype.itemsize
                      + sum(int(p.size) * p.dtype.itemsize for p in params)
                      + B * latent_dim * 4 + B * n_points * out_dims * 4)

    latent, recon_flat = pl.pallas_call(
        _fused_ae_kernel,
        out_shape=(
            jax.ShapeDtypeStruct((B, latent_dim), jnp.float32),
            jax.ShapeDtypeStruct((B, n_points * out_dims), jnp.float32),
        ),
        grid=(B // TB,),
        in_specs=[pl.BlockSpec((TB, N, Cin), lambda b: (b, 0, 0))]
                 + [_rep_spec(p) for p in params],
        out_specs=(
            pl.BlockSpec((TB, latent_dim), lambda b: (b, 0)),
            pl.BlockSpec((TB, n_points * out_dims), lambda b: (b, 0)),
        ),
        compiler_params=pltpu.CompilerParams(dimension_semantics=("parallel",)),
        cost_estimate=pl.CostEstimate(flops=int(flops), transcendentals=0,
                                      bytes_accessed=int(bytes_accessed)),
    )(x, *params)

    recon = recon_flat.reshape(B, n_points, out_dims)
    return recon, latent


# ----------------------------- parameter construction -----------------------------------


def _fold_bn(w, b, gamma, beta, mean, var, eps=1e-5):
    """Fold eval-mode BatchNorm1d into the preceding linear/conv1x1 layer."""
    s = gamma / jnp.sqrt(var + eps)
    w_eff = w * s[None, :]
    b_eff = (b - mean) * s + beta
    return w_eff.astype(jnp.float32), b_eff.reshape(1, -1).astype(jnp.float32)


def _layer(key, fan_in, fan_out, with_bn=True):
    kw, kb, kg, kbe, km, kv = jax.random.split(key, 6)
    w = 0.1 * jax.random.normal(kw, (fan_in, fan_out), jnp.float32)
    b = 0.1 * jax.random.normal(kb, (fan_out,), jnp.float32)
    if not with_bn:
        return w, b.reshape(1, -1)
    gamma = 1.0 + 0.1 * jax.random.normal(kg, (fan_out,), jnp.float32)
    beta = 0.1 * jax.random.normal(kbe, (fan_out,), jnp.float32)
    mean = 0.1 * jax.random.normal(km, (fan_out,), jnp.float32)
    var = 0.5 + jax.random.uniform(kv, (fan_out,), jnp.float32)
    return _fold_bn(w, b, gamma, beta, mean, var)


def make_params(key, in_dims=3, latent=128, n_points=64):
    assert latent == 128  # TODO(synk): conv5/bn5 branch (latent != 128) not exercised here
    keys = jax.random.split(key, 7)
    # encoder: in_dims > 64 > 64 > 64 > 128  (conv1x1 + BN + ReLU each)
    enc = []
    sizes = [in_dims, 64, 64, 64, latent]
    for i in range(4):
        w, b = _layer(keys[i], sizes[i], sizes[i + 1], with_bn=True)
        enc += [w, b]
    # decoder: latent > n/2 (BN,ReLU) > n (BN,ReLU) > 3n
    dec = []
    dsizes = [latent, n_points // 2, n_points, 3 * n_points]
    for i in range(3):
        w, b = _layer(keys[4 + i], dsizes[i], dsizes[i + 1], with_bn=(i < 2))
        dec += [w, b]
    return tuple(enc), tuple(dec)


def _reference(x, enc, dec, n_points, out_dims):
    """Pure-JAX f32 reference for correctness checking."""
    e = x
    for i in range(4):
        e = jnp.maximum(e @ enc[2 * i] + enc[2 * i + 1], 0.0)
    latent = jnp.max(e, axis=1)
    h = jnp.maximum(latent @ dec[0] + dec[1], 0.0)
    h = jnp.maximum(h @ dec[2] + dec[3], 0.0)
    h = h @ dec[4] + dec[5]
    return h.reshape(x.shape[0], n_points, out_dims), latent


# ----------------------------- main ------------------------------------------------------

if __name__ == "__main__":
    B, N, IN_DIMS, LATENT = 2, 64, 3, 128

    key = jax.random.PRNGKey(0)
    kx, kp = jax.random.split(key)
    x = jax.random.normal(kx, (B, N, IN_DIMS), jnp.float32)  # (B, N_points, in_dim)
    enc_params, dec_params = make_params(kp, IN_DIMS, LATENT, N)

    recon, latent = pointnet_ae_forward(x, enc_params, dec_params, N, IN_DIMS)
    recon = jax.block_until_ready(recon)
    latent = jax.block_until_ready(latent)

    assert recon.shape == (B, N, IN_DIMS) and latent.shape == (B, LATENT)

    ref_recon, ref_latent = _reference(x, enc_params, dec_params, N, IN_DIMS)
    # bf16 MXU operands with f32 accumulation -> loosen tolerance vs. the f32 reference.
    assert jnp.allclose(latent, ref_latent, atol=2e-2, rtol=2e-2)
    assert jnp.allclose(recon, ref_recon, atol=2e-2, rtol=2e-2)

    print("KERNEL_OK")
</pallas_src>

<mosaic_0001>
module attributes {stable_mosaic.version = 11 : i64} {
  func.func @_fused_ae_kernel(%arg0: i32, %arg1: memref<2x64x3xf32, #tpu.memory_space<vmem>>, %arg2: memref<3x64xf32, #tpu.memory_space<vmem>>, %arg3: memref<1x64xf32, #tpu.memory_space<vmem>>, %arg4: memref<64x64xbf16, #tpu.memory_space<vmem>>, %arg5: memref<1x64xf32, #tpu.memory_space<vmem>>, %arg6: memref<64x64xbf16, #tpu.memory_space<vmem>>, %arg7: memref<1x64xf32, #tpu.memory_space<vmem>>, %arg8: memref<64x128xbf16, #tpu.memory_space<vmem>>, %arg9: memref<1x128xf32, #tpu.memory_space<vmem>>, %arg10: memref<128x32xbf16, #tpu.memory_space<vmem>>, %arg11: memref<1x32xf32, #tpu.memory_space<vmem>>, %arg12: memref<32x64xbf16, #tpu.memory_space<vmem>>, %arg13: memref<1x64xf32, #tpu.memory_space<vmem>>, %arg14: memref<64x192xbf16, #tpu.memory_space<vmem>>, %arg15: memref<1x192xf32, #tpu.memory_space<vmem>>, %arg16: memref<2x128xf32, #tpu.memory_space<vmem>>, %arg17: memref<2x192xf32, #tpu.memory_space<vmem>>) attributes {dimension_semantics = [#tpu.dimension_semantics<parallel>], iteration_bounds = array<i64: 1>, scalar_prefetch = 0 : i64, scratch_operands = 0 : i64, tpu.core_type = #tpu.core_type<tc>, window_params = [{transform_indices = @transform_0, window_bounds = array<i64: 2, 64, 3>}, {pipeline_mode = #tpu.pipeline_mode<synchronous>, transform_indices = @transform_1, window_bounds = array<i64: 3, 64>}, {pipeline_mode = #tpu.pipeline_mode<synchronous>, transform_indices = @transform_2, window_bounds = array<i64: 1, 64>}, {pipeline_mode = #tpu.pipeline_mode<synchronous>, transform_indices = @transform_3, window_bounds = array<i64: 64, 64>}, {pipeline_mode = #tpu.pipeline_mode<synchronous>, transform_indices = @transform_4, window_bounds = array<i64: 1, 64>}, {pipeline_mode = #tpu.pipeline_mode<synchronous>, transform_indices = @transform_5, window_bounds = array<i64: 64, 64>}, {pipeline_mode = #tpu.pipeline_mode<synchronous>, transform_indices = @transform_6, window_bounds = array<i64: 1, 64>}, {pipeline_mode = #tpu.pipeline_mode<synchronous>, transform_indices = @transform_7, window_bounds = array<i64: 64, 128>}, {pipeline_mode = #tpu.pipeline_mode<synchronous>, transform_indices = @transform_8, window_bounds = array<i64: 1, 128>}, {pipeline_mode = #tpu.pipeline_mode<synchronous>, transform_indices = @transform_9, window_bounds = array<i64: 128, 32>}, {pipeline_mode = #tpu.pipeline_mode<synchronous>, transform_indices = @transform_10, window_bounds = array<i64: 1, 32>}, {pipeline_mode = #tpu.pipeline_mode<synchronous>, transform_indices = @transform_11, window_bounds = array<i64: 32, 64>}, {pipeline_mode = #tpu.pipeline_mode<synchronous>, transform_indices = @transform_12, window_bounds = array<i64: 1, 64>}, {pipeline_mode = #tpu.pipeline_mode<synchronous>, transform_indices = @transform_13, window_bounds = array<i64: 64, 192>}, {pipeline_mode = #tpu.pipeline_mode<synchronous>, transform_indices = @transform_14, window_bounds = array<i64: 1, 192>}, {transform_indices = @transform_15, window_bounds = array<i64: 2, 128>}, {transform_indices = @transform_16, window_bounds = array<i64: 2, 192>}]} {
    %c0 = arith.constant 0 : index
    %c0_0 = arith.constant 0 : index
    %c0_1 = arith.constant 0 : index
    %0 = vector.load %arg1[%c0, %c0_0, %c0_1] : memref<2x64x3xf32, #tpu.memory_space<vmem>>, vector<2x64x3xf32>
    %1 = vector.shape_cast %0 : vector<2x64x3xf32> to vector<128x3xf32>
    %c0_2 = arith.constant 0 : index
    %c0_3 = arith.constant 0 : index
    %2 = vector.load %arg2[%c0_2, %c0_3] : memref<3x64xf32, #tpu.memory_space<vmem>>, vector<3x64xf32>
    %3 = vector.extract_strided_slice %1 {offsets = [0, 0], sizes = [128, 1], strides = [1, 1]} : vector<128x3xf32> to vector<128x1xf32>
    %4 = vector.extract_strided_slice %2 {offsets = [0, 0], sizes = [1, 64], strides = [1, 1]} : vector<3x64xf32> to vector<1x64xf32>
    %5 = vector.broadcast %3 : vector<128x1xf32> to vector<128x64xf32>
    %6 = vector.broadcast %4 : vector<1x64xf32> to vector<128x64xf32>
    %7 = arith.mulf %5, %6 : vector<128x64xf32>
    %8 = vector.extract_strided_slice %1 {offsets = [0, 1], sizes = [128, 1], strides = [1, 1]} : vector<128x3xf32> to vector<128x1xf32>
    %9 = vector.extract_strided_slice %2 {offsets = [1, 0], sizes = [1, 64], strides = [1, 1]} : vector<3x64xf32> to vector<1x64xf32>
    %10 = vector.broadcast %8 : vector<128x1xf32> to vector<128x64xf32>
    %11 = vector.broadcast %9 : vector<1x64xf32> to vector<128x64xf32>
    %12 = arith.mulf %10, %11 : vector<128x64xf32>
    %13 = arith.addf %7, %12 : vector<128x64xf32>
    %14 = vector.extract_strided_slice %1 {offsets = [0, 2], sizes = [128, 1], strides = [1, 1]} : vector<128x3xf32> to vector<128x1xf32>
    %15 = vector.extract_strided_slice %2 {offsets = [2, 0], sizes = [1, 64], strides = [1, 1]} : vector<3x64xf32> to vector<1x64xf32>
    %16 = vector.broadcast %14 : vector<128x1xf32> to vector<128x64xf32>
    %17 = vector.broadcast %15 : vector<1x64xf32> to vector<128x64xf32>
    %18 = arith.mulf %16, %17 : vector<128x64xf32>
    %19 = arith.addf %13, %18 : vector<128x64xf32>
    %c0_4 = arith.constant 0 : index
    %c0_5 = arith.constant 0 : index
    %20 = vector.load %arg3[%c0_4, %c0_5] : memref<1x64xf32, #tpu.memory_space<vmem>>, vector<1x64xf32>
    %21 = vector.broadcast %20 : vector<1x64xf32> to vector<128x64xf32>
    %22 = arith.addf %19, %21 : vector<128x64xf32>
    %cst = arith.constant 0.000000e+00 : f32
    %23 = vector.broadcast %cst : f32 to vector<128x64xf32>
    %24 = arith.maximumf %22, %23 : vector<128x64xf32>
    %c0_6 = arith.constant 0 : index
    %c0_7 = arith.constant 0 : index
    %25 = vector.load %arg4[%c0_6, %c0_7] : memref<64x64xbf16, #tpu.memory_space<vmem>>, vector<64x64xbf16>
    %26 = arith.truncf %24 : vector<128x64xf32> to vector<128x64xbf16>
    %cst_8 = arith.constant dense<0.000000e+00> : vector<128x64xf32>
    %27 = tpu.matmul %26, %25, %cst_8 {dimension_numbers = #tpu.dot_dimension_numbers<[1], [0], [0], [1], [0, 0, 1, 1], [], []>} : vector<128x64xbf16>, vector<64x64xbf16>, vector<128x64xf32> -> vector<128x64xf32>
    %c0_9 = arith.constant 0 : index
    %c0_10 = arith.constant 0 : index
    %28 = vector.load %arg5[%c0_9, %c0_10] : memref<1x64xf32, #tpu.memory_space<vmem>>, vector<1x64xf32>
    %29 = vector.broadcast %28 : vector<1x64xf32> to vector<128x64xf32>
    %30 = arith.addf %27, %29 : vector<128x64xf32>
    %cst_11 = arith.constant 0.000000e+00 : f32
    %31 = vector.broadcast %cst_11 : f32 to vector<128x64xf32>
    %32 = arith.maximumf %30, %31 : vector<128x64xf32>
    %c0_12 = arith.constant 0 : index
    %c0_13 = arith.constant 0 : index
    %33 = vector.load %arg6[%c0_12, %c0_13] : memref<64x64xbf16, #tpu.memory_space<vmem>>, vector<64x64xbf16>
    %34 = arith.truncf %32 : vector<128x64xf32> to vector<128x64xbf16>
    %cst_14 = arith.constant dense<0.000000e+00> : vector<128x64xf32>
    %35 = tpu.matmul %34, %33, %cst_14 {dimension_numbers = #tpu.dot_dimension_numbers<[1], [0], [0], [1], [0, 0, 1, 1], [], []>} : vector<128x64xbf16>, vector<64x64xbf16>, vector<128x64xf32> -> vector<128x64xf32>
    %c0_15 = arith.constant 0 : index
    %c0_16 = arith.constant 0 : index
    %36 = vector.load %arg7[%c0_15, %c0_16] : memref<1x64xf32, #tpu.memory_space<vmem>>, vector<1x64xf32>
    %37 = vector.broadcast %36 : vector<1x64xf32> to vector<128x64xf32>
    %38 = arith.addf %35, %37 : vector<128x64xf32>
    %cst_17 = arith.constant 0.000000e+00 : f32
    %39 = vector.broadcast %cst_17 : f32 to vector<128x64xf32>
    %40 = arith.maximumf %38, %39 : vector<128x64xf32>
    %c0_18 = arith.constant 0 : index
    %c0_19 = arith.constant 0 : index
    %41 = vector.load %arg8[%c0_18, %c0_19] : memref<64x128xbf16, #tpu.memory_space<vmem>>, vector<64x128xbf16>
    %42 = arith.truncf %40 : vector<128x64xf32> to vector<128x64xbf16>
    %cst_20 = arith.constant dense<0.000000e+00> : vector<128x128xf32>
    %43 = tpu.matmul %42, %41, %cst_20 {dimension_numbers = #tpu.dot_dimension_numbers<[1], [0], [0], [1], [0, 0, 1, 1], [], []>} : vector<128x64xbf16>, vector<64x128xbf16>, vector<128x128xf32> -> vector<128x128xf32>
    %c0_21 = arith.constant 0 : index
    %c0_22 = arith.constant 0 : index
    %44 = vector.load %arg9[%c0_21, %c0_22] : memref<1x128xf32, #tpu.memory_space<vmem>>, vector<1x128xf32>
    %45 = vector.broadcast %44 : vector<1x128xf32> to vector<128x128xf32>
    %46 = arith.addf %43, %45 : vector<128x128xf32>
    %cst_23 = arith.constant 0.000000e+00 : f32
    %47 = vector.broadcast %cst_23 : f32 to vector<128x128xf32>
    %48 = arith.maximumf %46, %47 : vector<128x128xf32>
    %49 = vector.shape_cast %48 : vector<128x128xf32> to vector<2x64x128xf32>
    %cst_24 = arith.constant dense<0xFF800000> : vector<2x128xf32>
    %50 = vector.multi_reduction <maximumf>, %49, %cst_24 [1] : vector<2x64x128xf32> to vector<2x128xf32>
    %c0_25 = arith.constant 0 : index
    %c0_26 = arith.constant 0 : index
    %51 = vector.load %arg16[%c0_25, %c0_26] : memref<2x128xf32, #tpu.memory_space<vmem>>, vector<2x128xf32>
    tpu.vector_store %arg16[%c0_25, %c0_26], %50 {strides = array<i32>} : memref<2x128xf32, #tpu.memory_space<vmem>>, vector<2x128xf32>,
    %c0_27 = arith.constant 0 : index
    %c0_28 = arith.constant 0 : index
    %52 = vector.load %arg10[%c0_27, %c0_28] : memref<128x32xbf16, #tpu.memory_space<vmem>>, vector<128x32xbf16>
    %53 = arith.truncf %50 : vector<2x128xf32> to vector<2x128xbf16>
    %cst_29 = arith.constant dense<0.000000e+00> : vector<2x32xf32>
    %54 = tpu.matmul %53, %52, %cst_29 {dimension_numbers = #tpu.dot_dimension_numbers<[1], [0], [0], [1], [0, 0, 1, 1], [], []>} : vector<2x128xbf16>, vector<128x32xbf16>, vector<2x32xf32> -> vector<2x32xf32>
    %c0_30 = arith.constant 0 : index
    %c0_31 = arith.constant 0 : index
    %55 = vector.load %arg11[%c0_30, %c0_31] : memref<1x32xf32, #tpu.memory_space<vmem>>, vector<1x32xf32>
    %56 = vector.broadcast %55 : vector<1x32xf32> to vector<2x32xf32>
    %57 = arith.addf %54, %56 : vector<2x32xf32>
    %cst_32 = arith.constant 0.000000e+00 : f32
    %58 = vector.broadcast %cst_32 : f32 to vector<2x32xf32>
    %59 = arith.maximumf %57, %58 : vector<2x32xf32>
    %c0_33 = arith.constant 0 : index
    %c0_34 = arith.constant 0 : index
    %60 = vector.load %arg12[%c0_33, %c0_34] : memref<32x64xbf16, #tpu.memory_space<vmem>>, vector<32x64xbf16>
    %61 = arith.truncf %59 : vector<2x32xf32> to vector<2x32xbf16>
    %cst_35 = arith.constant dense<0.000000e+00> : vector<2x64xf32>
    %62 = tpu.matmul %61, %60, %cst_35 {dimension_numbers = #tpu.dot_dimension_numbers<[1], [0], [0], [1], [0, 0, 1, 1], [], []>} : vector<2x32xbf16>, vector<32x64xbf16>, vector<2x64xf32> -> vector<2x64xf32>
    %c0_36 = arith.constant 0 : index
    %c0_37 = arith.constant 0 : index
    %63 = vector.load %arg13[%c0_36, %c0_37] : memref<1x64xf32, #tpu.memory_space<vmem>>, vector<1x64xf32>
    %64 = vector.broadcast %63 : vector<1x64xf32> to vector<2x64xf32>
    %65 = arith.addf %62, %64 : vector<2x64xf32>
    %cst_38 = arith.constant 0.000000e+00 : f32
    %66 = vector.broadcast %cst_38 : f32 to vector<2x64xf32>
    %67 = arith.maximumf %65, %66 : vector<2x64xf32>
    %c0_39 = arith.constant 0 : index
    %c0_40 = arith.constant 0 : index
    %68 = vector.load %arg14[%c0_39, %c0_40] : memref<64x192xbf16, #tpu.memory_space<vmem>>, vector<64x192xbf16>
    %69 = arith.truncf %67 : vector<2x64xf32> to vector<2x64xbf16>
    %cst_41 = arith.constant dense<0.000000e+00> : vector<2x192xf32>
    %70 = tpu.matmul %69, %68, %cst_41 {dimension_numbers = #tpu.dot_dimension_numbers<[1], [0], [0], [1], [0, 0, 1, 1], [], []>} : vector<2x64xbf16>, vector<64x192xbf16>, vector<2x192xf32> -> vector<2x192xf32>
    %c0_42 = arith.constant 0 : index
    %c0_43 = arith.constant 0 : index
    %71 = vector.load %arg15[%c0_42, %c0_43] : memref<1x192xf32, #tpu.memory_space<vmem>>, vector<1x192xf32>
    %72 = vector.broadcast %71 : vector<1x192xf32> to vector<2x192xf32>
    %73 = arith.addf %70, %72 : vector<2x192xf32>
    %c0_44 = arith.constant 0 : index
    %c0_45 = arith.constant 0 : index
    %74 = vector.load %arg17[%c0_44, %c0_45] : memref<2x192xf32, #tpu.memory_space<vmem>>, vector<2x192xf32>
    tpu.vector_store %arg17[%c0_44, %c0_45], %73 {strides = array<i32>} : memref<2x192xf32, #tpu.memory_space<vmem>>, vector<2x192xf32>,
    return
  }
  func.func @transform_0(%arg0: i32) -> (i32, i32, i32) {
    %c0_i32 = arith.constant 0 : i32
    %c0_i32_0 = arith.constant 0 : i32
    %c0_i32_1 = arith.constant 0 : i32
    return %arg0, %c0_i32, %c0_i32_0 : i32, i32, i32
  }
  func.func @transform_1(%arg0: i32) -> (i32, i32) {
    %c0_i32 = arith.constant 0 : i32
    %c0_i32_0 = arith.constant 0 : i32
    %c0_i32_1 = arith.constant 0 : i32
    return %c0_i32, %c0_i32_0 : i32, i32
  }
  func.func @transform_2(%arg0: i32) -> (i32, i32) {
    %c0_i32 = arith.constant 0 : i32
    %c0_i32_0 = arith.constant 0 : i32
    %c0_i32_1 = arith.constant 0 : i32
    return %c0_i32, %c0_i32_0 : i32, i32
  }
  func.func @transform_3(%arg0: i32) -> (i32, i32) {
    %c0_i32 = arith.constant 0 : i32
    %c0_i32_0 = arith.constant 0 : i32
    %c0_i32_1 = arith.constant 0 : i32
    return %c0_i32, %c0_i32_0 : i32, i32
  }
  func.func @transform_4(%arg0: i32) -> (i32, i32) {
    %c0_i32 = arith.constant 0 : i32
    %c0_i32_0 = arith.constant 0 : i32
    %c0_i32_1 = arith.constant 0 : i32
    return %c0_i32, %c0_i32_0 : i32, i32
  }
  func.func @transform_5(%arg0: i32) -> (i32, i32) {
    %c0_i32 = arith.constant 0 : i32
    %c0_i32_0 = arith.constant 0 : i32
    %c0_i32_1 = arith.constant 0 : i32
    return %c0_i32, %c0_i32_0 : i32, i32
  }
  func.func @transform_6(%arg0: i32) -> (i32, i32) {
    %c0_i32 = arith.constant 0 : i32
    %c0_i32_0 = arith.constant 0 : i32
    %c0_i32_1 = arith.constant 0 : i32
    return %c0_i32, %c0_i32_0 : i32, i32
  }
  func.func @transform_7(%arg0: i32) -> (i32, i32) {
    %c0_i32 = arith.constant 0 : i32
    %c0_i32_0 = arith.constant 0 : i32
    %c0_i32_1 = arith.constant 0 : i32
    return %c0_i32, %c0_i32_0 : i32, i32
  }
  func.func @transform_8(%arg0: i32) -> (i32, i32) {
    %c0_i32 = arith.constant 0 : i32
    %c0_i32_0 = arith.constant 0 : i32
    %c0_i32_1 = arith.constant 0 : i32
    return %c0_i32, %c0_i32_0 : i32, i32
  }
  func.func @transform_9(%arg0: i32) -> (i32, i32) {
    %c0_i32 = arith.constant 0 : i32
    %c0_i32_0 = arith.constant 0 : i32
    %c0_i32_1 = arith.constant 0 : i32
    return %c0_i32, %c0_i32_0 : i32, i32
  }
  func.func @transform_10(%arg0: i32) -> (i32, i32) {
    %c0_i32 = arith.constant 0 : i32
    %c0_i32_0 = arith.constant 0 : i32
    %c0_i32_1 = arith.constant 0 : i32
    return %c0_i32, %c0_i32_0 : i32, i32
  }
  func.func @transform_11(%arg0: i32) -> (i32, i32) {
    %c0_i32 = arith.constant 0 : i32
    %c0_i32_0 = arith.constant 0 : i32
    %c0_i32_1 = arith.constant 0 : i32
    return %c0_i32, %c0_i32_0 : i32, i32
  }
  func.func @transform_12(%arg0: i32) -> (i32, i32) {
    %c0_i32 = arith.constant 0 : i32
    %c0_i32_0 = arith.constant 0 : i32
    %c0_i32_1 = arith.constant 0 : i32
    return %c0_i32, %c0_i32_0 : i32, i32
  }
  func.func @transform_13(%arg0: i32) -> (i32, i32) {
    %c0_i32 = arith.constant 0 : i32
    %c0_i32_0 = arith.constant 0 : i32
    %c0_i32_1 = arith.constant 0 : i32
    return %c0_i32, %c0_i32_0 : i32, i32
  }
  func.func @transform_14(%arg0: i32) -> (i32, i32) {
    %c0_i32 = arith.constant 0 : i32
    %c0_i32_0 = arith.constant 0 : i32
    %c0_i32_1 = arith.constant 0 : i32
    return %c0_i32, %c0_i32_0 : i32, i32
  }
  func.func @transform_15(%arg0: i32) -> (i32, i32) {
    %c0_i32 = arith.constant 0 : i32
    %c0_i32_0 = arith.constant 0 : i32
    return %arg0, %c0_i32 : i32, i32
  }
  func.func @transform_16(%arg0: i32) -> (i32, i32) {
    %c0_i32 = arith.constant 0 : i32
    %c0_i32_0 = arith.constant 0 : i32
    return %arg0, %c0_i32 : i32, i32
  }
}

</mosaic_0001>

<llo_original>
// kernel: tpu_custom_call.1
$region0: #{tpu_custom_call.1}
  #allocation0 [shape = 'u32[]', space=smem, size = 0x4, offset = 0x4, fixed_abs, tag = 'smem constant byte address 0x4 - core index']
  #allocation1 [shape = 'u32[72,128]{1,0:T(1,128)}', space=vmem, size = 0x9000, scoped, tag = 'internal scratch']
  %s0 = inlined_call_operand.vmem [shape: f32[2,64,3], index: 0, kind: input, shape index: {}]
  %s1 = inlined_call_operand.vmem [shape: f32[3,64], index: 1, kind: input, shape index: {}]
  %s2 = inlined_call_operand.vmem [shape: f32[1,64], index: 2, kind: input, shape index: {}]
  %s3 = inlined_call_operand.vmem [shape: bf16[64,64], index: 3, kind: input, shape index: {}]
  %s4 = inlined_call_operand.vmem [shape: f32[1,64], index: 4, kind: input, shape index: {}]
  %s5 = inlined_call_operand.vmem [shape: bf16[64,64], index: 5, kind: input, shape index: {}]
  %s6 = inlined_call_operand.vmem [shape: f32[1,64], index: 6, kind: input, shape index: {}]
  %s7 = inlined_call_operand.vmem [shape: bf16[64,128], index: 7, kind: input, shape index: {}]
  %s8 = inlined_call_operand.vmem [shape: f32[1,128], index: 8, kind: input, shape index: {}]
  %s9 = inlined_call_operand.vmem [shape: bf16[128,32], index: 9, kind: input, shape index: {}]
  %s10 = inlined_call_operand.vmem [shape: f32[1,32], index: 10, kind: input, shape index: {}]
  %s11 = inlined_call_operand.vmem [shape: bf16[32,64], index: 11, kind: input, shape index: {}]
  %s12 = inlined_call_operand.vmem [shape: f32[1,64], index: 12, kind: input, shape index: {}]
  %s13 = inlined_call_operand.vmem [shape: bf16[64,192], index: 13, kind: input, shape index: {}]
  %s14 = inlined_call_operand.vmem [shape: f32[1,192], index: 14, kind: input, shape index: {}]
  %s15 = inlined_call_operand.hbm [shape: f32[2,128], index: 15, kind: output, shape index: {0}]
  %s16 = inlined_call_operand.hbm [shape: f32[2,192], index: 16, kind: output, shape index: {1}]
  %17 = xla_tuple %s15, %s16
  %s18 = sld [smem:[#allocation0]]
  $region78: #{tpu_custom_call.1} parent=0
    _
  %s20 = ssub.s32 1, %s18
  %s21 = scalar_select 0, %s20, %s18
  $region1: #{tpu_custom_call.1} parent=0
    #allocation2 [shape = 'u8[1024]{0}', space=vmem, size = 0x400, scoped, tag = 'output window, operand 0, single buffered']
    #allocation3 [shape = 's32[1]{0}', space=sflag, size = 0x4, scoped, tag = 'scoped memory for tpu_custom_call.1']
    #allocation4 [shape = 'u8[2048]{0}', space=vmem, size = 0x800, scoped, tag = 'output window, operand 1, single buffered']
    #allocation5 [shape = 's32[1]{0}', space=sflag, size = 0x4, scoped, tag = 'scoped memory for tpu_custom_call.1']
    %22 = vsyncpa [#allocation3], 0
    %23 = vsyncpa [#allocation5], 0
    // Predicated region
    $region2: #{tpu_custom_call.1} parent=1 // pred_check
      _
    $region3: #{tpu_custom_call.1} parent=1 // pred_check_branch
      %25 = sbr.rel (0) target = $region5
    $region4: #{tpu_custom_call.1} parent=1 // pred_region
      _
    $region5: #{tpu_custom_call.1} parent=1 // pred_fallthru
      _
    // Predicated region
    $region6: #{tpu_custom_call.1} parent=1 // pred_check
      _
    $region7: #{tpu_custom_call.1} parent=1 // pred_check_branch
      %27 = sbr.rel (0) target = $region9
    $region8: #{tpu_custom_call.1} parent=1 // pred_region
      _
    $region9: #{tpu_custom_call.1} parent=1 // pred_fallthru
      _
    // Predicated region
    $region10: #{tpu_custom_call.1} parent=1 // pred_check
      _
    $region11: #{tpu_custom_call.1} parent=1 // pred_check_branch
      %29 = sbr.rel (0) target = $region13
    $region12: #{tpu_custom_call.1} parent=1 // pred_region
      _
    $region13: #{tpu_custom_call.1} parent=1 // pred_fallthru
      _
    // Predicated region
    $region14: #{tpu_custom_call.1} parent=1 // pred_check
      _
    $region15: #{tpu_custom_call.1} parent=1 // pred_check_branch
      %31 = sbr.rel (0) target = $region17
    $region16: #{tpu_custom_call.1} parent=1 // pred_region
      _
    $region17: #{tpu_custom_call.1} parent=1 // pred_fallthru
      _
    // Predicated region
    $region18: #{tpu_custom_call.1} parent=1 // pred_check
      _
    $region19: #{tpu_custom_call.1} parent=1 // pred_check_branch
      %33 = sbr.rel (0) target = $region21
    $region20: #{tpu_custom_call.1} parent=1 // pred_region
      _
    $region21: #{tpu_custom_call.1} parent=1 // pred_fallthru
      _
    // Predicated region
    $region22: #{tpu_custom_call.1} parent=1 // pred_check
      _
    $region23: #{tpu_custom_call.1} parent=1 // pred_check_branch
      %35 = sbr.rel (0) target = $region25
    $region24: #{tpu_custom_call.1} parent=1 // pred_region
      _
    $region25: #{tpu_custom_call.1} parent=1 // pred_fallthru
      _
    // Predicated region
    $region26: #{tpu_custom_call.1} parent=1 // pred_check
      _
    $region27: #{tpu_custom_call.1} parent=1 // pred_check_branch
      %37 = sbr.rel (0) target = $region29
    $region28: #{tpu_custom_call.1} parent=1 // pred_region
      _
    $region29: #{tpu_custom_call.1} parent=1 // pred_fallthru
      _
    // Predicated region
    $region30: #{tpu_custom_call.1} parent=1 // pred_check
      _
    $region31: #{tpu_custom_call.1} parent=1 // pred_check_branch
      %39 = sbr.rel (0) target = $region33
    $region32: #{tpu_custom_call.1} parent=1 // pred_region
      _
    $region33: #{tpu_custom_call.1} parent=1 // pred_fallthru
      _
    // Predicated region
    $region34: #{tpu_custom_call.1} parent=1 // pred_check
      _
    $region35: #{tpu_custom_call.1} parent=1 // pred_check_branch
      %41 = sbr.rel (0) target = $region37
    $region36: #{tpu_custom_call.1} parent=1 // pred_region
      _
    $region37: #{tpu_custom_call.1} parent=1 // pred_fallthru
      _
    // Predicated region
    $region38: #{tpu_custom_call.1} parent=1 // pred_check
      _
    $region39: #{tpu_custom_call.1} parent=1 // pred_check_branch
      %43 = sbr.rel (0) target = $region41
    $region40: #{tpu_custom_call.1} parent=1 // pred_region
      _
    $region41: #{tpu_custom_call.1} parent=1 // pred_fallthru
      _
    // Predicated region
    $region42: #{tpu_custom_call.1} parent=1 // pred_check
      _
    $region43: #{tpu_custom_call.1} parent=1 // pred_check_branch
      %45 = sbr.rel (0) target = $region45
    $region44: #{tpu_custom_call.1} parent=1 // pred_region
      _
    $region45: #{tpu_custom_call.1} parent=1 // pred_fallthru
      _
    // Predicated region
    $region46: #{tpu_custom_call.1} parent=1 // pred_check
      _
    $region47: #{tpu_custom_call.1} parent=1 // pred_check_branch
      %47 = sbr.rel (0) target = $region49
    $region48: #{tpu_custom_call.1} parent=1 // pred_region
      _
    $region49: #{tpu_custom_call.1} parent=1 // pred_fallthru
      _
    // Predicated region
    $region50: #{tpu_custom_call.1} parent=1 // pred_check
      _
    $region51: #{tpu_custom_call.1} parent=1 // pred_check_branch
      %49 = sbr.rel (0) target = $region53
    $region52: #{tpu_custom_call.1} parent=1 // pred_region
      _
    $region53: #{tpu_custom_call.1} parent=1 // pred_fallthru
      _
    // Predicated region
    $region54: #{tpu_custom_call.1} parent=1 // pred_check
      _
    $region55: #{tpu_custom_call.1} parent=1 // pred_check_branch
      %51 = sbr.rel (0) target = $region57
    $region56: #{tpu_custom_call.1} parent=1 // pred_region
      _
    $region57: #{tpu_custom_call.1} parent=1 // pred_fallthru
      _
    // Predicated region
    $region58: #{tpu_custom_call.1} parent=1 // pred_check
      _
    $region59: #{tpu_custom_call.1} parent=1 // pred_check_branch
      %53 = sbr.rel (0) target = $region61
    $region60: #{tpu_custom_call.1} parent=1 // pred_region
      _
    $region61: #{tpu_custom_call.1} parent=1 // pred_fallthru
      _
    %v55 = vld [vmem:[%s0] sm:$0xff]
    %v56 = vld [vmem:[%s0 + $0x8] sm:$0xff]
    %v57 = vld [vmem:[%s0 + $0x10] sm:$0xff]
    %v58 = vld [vmem:[%s0 + $0x18] sm:$0xff]
    %v59 = vld [vmem:[%s0 + $0x20] sm:$0xff]
    %v60 = vld [vmem:[%s0 + $0x28] sm:$0xff]
    %v61 = vld [vmem:[%s0 + $0x30] sm:$0xff]
    %v62 = vld [vmem:[%s0 + $0x38] sm:$0xff]
    %v63 = vld [vmem:[%s0 + $0x40] sm:$0xff]
    %v64 = vld [vmem:[%s0 + $0x48] sm:$0xff]
    %v65 = vld [vmem:[%s0 + $0x50] sm:$0xff]
    %v66 = vld [vmem:[%s0 + $0x58] sm:$0xff]
    %v67 = vld [vmem:[%s0 + $0x60] sm:$0xff]
    %v68 = vld [vmem:[%s0 + $0x68] sm:$0xff]
    %v69 = vld [vmem:[%s0 + $0x70] sm:$0xff]
    %v70 = vld [vmem:[%s0 + $0x78] sm:$0xff]
    %v71 = vld [vmem:[%s1] sm:$0x7]
    %73 = vset.pattern.permute.xlu0 0
    %74 = vperm.xlu0 %73, %v55
    %v75 = vpop.permute.xlu0 %74
    %78 = vset.pattern.permute.xlu0 0
    %79 = vperm.xlu0 %78, %v56
    %v80 = vpop.permute.xlu0 %79
    %83 = vset.pattern.permute.xlu0 0
    %84 = vperm.xlu0 %83, %v57
    %v85 = vpop.permute.xlu0 %84
    %88 = vset.pattern.permute.xlu0 0
    %89 = vperm.xlu0 %88, %v58
    %v90 = vpop.permute.xlu0 %89
    %93 = vset.pattern.permute.xlu0 0
    %94 = vperm.xlu0 %93, %v59
    %v95 = vpop.permute.xlu0 %94
    %98 = vset.pattern.permute.xlu0 0
    %99 = vperm.xlu0 %98, %v60
    %v100 = vpop.permute.xlu0 %99
    %103 = vset.pattern.permute.xlu0 0
    %104 = vperm.xlu0 %103, %v61
    %v105 = vpop.permute.xlu0 %104
    %108 = vset.pattern.permute.xlu0 0
    %109 = vperm.xlu0 %108, %v62
    %v110 = vpop.permute.xlu0 %109
    %113 = vset.pattern.permute.xlu0 0
    %114 = vperm.xlu0 %113, %v63
    %v115 = vpop.permute.xlu0 %114
    %118 = vset.pattern.permute.xlu0 0
    %119 = vperm.xlu0 %118, %v64
    %v120 = vpop.permute.xlu0 %119
    %123 = vset.pattern.permute.xlu0 0
    %124 = vperm.xlu0 %123, %v65
    %v125 = vpop.permute.xlu0 %124
    %128 = vset.pattern.permute.xlu0 0
    %129 = vperm.xlu0 %128, %v66
    %v130 = vpop.permute.xlu0 %129
    %133 = vset.pattern.permute.xlu0 0
    %134 = vperm.xlu0 %133, %v67
    %v135 = vpop.permute.xlu0 %134
    %138 = vset.pattern.permute.xlu0 0
    %139 = vperm.xlu0 %138, %v68
    %v140 = vpop.permute.xlu0 %139
    %143 = vset.pattern.permute.xlu0 0
    %144 = vperm.xlu0 %143, %v69
    %v145 = vpop.permute.xlu0 %144
    %148 = vset.pattern.permute.xlu0 0
    %149 = vperm.xlu0 %148, %v70
    %v150 = vpop.permute.xlu0 %149
    %v152 = vperm.slane %v71, 0
    %v153 = vmul.f32 %v75, %v152
    %v154 = vmul.f32 %v80, %v152
    %v155 = vmul.f32 %v85, %v152
    %v156 = vmul.f32 %v90, %v152
    %v157 = vmul.f32 %v95, %v152
    %v158 = vmul.f32 %v100, %v152
    %v159 = vmul.f32 %v105, %v152
    %v160 = vmul.f32 %v110, %v152
    %v161 = vmul.f32 %v115, %v152
    %v162 = vmul.f32 %v120, %v152
    %v163 = vmul.f32 %v125, %v152
    %v164 = vmul.f32 %v130, %v152
    %v165 = vmul.f32 %v135, %v152
    %v166 = vmul.f32 %v140, %v152
    %v167 = vmul.f32 %v145, %v152
    %v168 = vmul.f32 %v150, %v152
    %169 = vset.pattern.permute.xlu0 1
    %170 = vperm.xlu0 %169, %v55
    %v171 = vpop.permute.xlu0 %170
    %173 = vset.pattern.permute.xlu0 1
    %174 = vperm.xlu0 %173, %v56
    %v175 = vpop.permute.xlu0 %174
    %177 = vset.pattern.permute.xlu0 1
    %178 = vperm.xlu0 %177, %v57
    %v179 = vpop.permute.xlu0 %178
    %181 = vset.pattern.permute.xlu0 1
    %182 = vperm.xlu0 %181, %v58
    %v183 = vpop.permute.xlu0 %182
    %185 = vset.pattern.permute.xlu0 1
    %186 = vperm.xlu0 %185, %v59
    %v187 = vpop.permute.xlu0 %186
    %189 = vset.pattern.permute.xlu0 1
    %190 = vperm.xlu0 %189, %v60
    %v191 = vpop.permute.xlu0 %190
    %193 = vset.pattern.permute.xlu0 1
    %194 = vperm.xlu0 %193, %v61
    %v195 = vpop.permute.xlu0 %194
    %197 = vset.pattern.permute.xlu0 1
    %198 = vperm.xlu0 %197, %v62
    %v199 = vpop.permute.xlu0 %198
    %201 = vset.pattern.permute.xlu0 1
    %202 = vperm.xlu0 %201, %v63
    %v203 = vpop.permute.xlu0 %202
    %205 = vset.pattern.permute.xlu0 1
    %206 = vperm.xlu0 %205, %v64
    %v207 = vpop.permute.xlu0 %206
    %209 = vset.pattern.permute.xlu0 1
    %210 = vperm.xlu0 %209, %v65
    %v211 = vpop.permute.xlu0 %210
    %213 = vset.pattern.permute.xlu0 1
    %214 = vperm.xlu0 %213, %v66
    %v215 = vpop.permute.xlu0 %214
    %217 = vset.pattern.permute.xlu0 1
    %218 = vperm.xlu0 %217, %v67
    %v219 = vpop.permute.xlu0 %218
    %221 = vset.pattern.permute.xlu0 1
    %222 = vperm.xlu0 %221, %v68
    %v223 = vpop.permute.xlu0 %222
    %225 = vset.pattern.permute.xlu0 1
    %226 = vperm.xlu0 %225, %v69
    %v227 = vpop.permute.xlu0 %226
    %229 = vset.pattern.permute.xlu0 1
    %230 = vperm.xlu0 %229, %v70
    %v231 = vpop.permute.xlu0 %230
    %v233 = vperm.slane %v71, 1
    %v234 = vmul.f32 %v171, %v233
    %v235 = vmul.f32 %v175, %v233
    %v236 = vmul.f32 %v179, %v233
    %v237 = vmul.f32 %v183, %v233
    %v238 = vmul.f32 %v187, %v233
    %v239 = vmul.f32 %v191, %v233
    %v240 = vmul.f32 %v195, %v233
    %v241 = vmul.f32 %v199, %v233
    %v242 = vmul.f32 %v203, %v233
    %v243 = vmul.f32 %v207, %v233
    %v244 = vmul.f32 %v211, %v233
    %v245 = vmul.f32 %v215, %v233
    %v246 = vmul.f32 %v219, %v233
    %v247 = vmul.f32 %v223, %v233
    %v248 = vmul.f32 %v227, %v233
    %v249 = vmul.f32 %v231, %v233
    %v250 = vadd.f32 %v153, %v234
    %v251 = vadd.f32 %v154, %v235
    %v252 = vadd.f32 %v155, %v236
    %v253 = vadd.f32 %v156, %v237
    %v254 = vadd.f32 %v157, %v238
    %v255 = vadd.f32 %v158, %v239
    %v256 = vadd.f32 %v159, %v240
    %v257 = vadd.f32 %v160, %v241
    %v258 = vadd.f32 %v161, %v242
    %v259 = vadd.f32 %v162, %v243
    %v260 = vadd.f32 %v163, %v244
    %v261 = vadd.f32 %v164, %v245
    %v262 = vadd.f32 %v165, %v246
    %v263 = vadd.f32 %v166, %v247
    %v264 = vadd.f32 %v167, %v248
    %v265 = vadd.f32 %v168, %v249
    %266 = vset.pattern.permute.xlu0 2
    %267 = vperm.xlu0 %266, %v55
    %v268 = vpop.permute.xlu0 %267
    %270 = vset.pattern.permute.xlu0 2
    %271 = vperm.xlu0 %270, %v56
    %v272 = vpop.permute.xlu0 %271
    %274 = vset.pattern.permute.xlu0 2
    %275 = vperm.xlu0 %274, %v57
    %v276 = vpop.permute.xlu0 %275
    %278 = vset.pattern.permute.xlu0 2
    %279 = vperm.xlu0 %278, %v58
    %v280 = vpop.permute.xlu0 %279
    %282 = vset.pattern.permute.xlu0 2
    %283 = vperm.xlu0 %282, %v59
    %v284 = vpop.permute.xlu0 %283
    %286 = vset.pattern.permute.xlu0 2
    %287 = vperm.xlu0 %286, %v60
    %v288 = vpop.permute.xlu0 %287
    %290 = vset.pattern.permute.xlu0 2
    %291 = vperm.xlu0 %290, %v61
    %v292 = vpop.permute.xlu0 %291
    %294 = vset.pattern.permute.xlu0 2
    %295 = vperm.xlu0 %294, %v62
    %v296 = vpop.permute.xlu0 %295
    %298 = vset.pattern.permute.xlu0 2
    %299 = vperm.xlu0 %298, %v63
    %v300 = vpop.permute.xlu0 %299
    %302 = vset.pattern.permute.xlu0 2
    %303 = vperm.xlu0 %302, %v64
    %v304 = vpop.permute.xlu0 %303
    %306 = vset.pattern.permute.xlu0 2
    %307 = vperm.xlu0 %306, %v65
    %v308 = vpop.permute.xlu0 %307
    %310 = vset.pattern.permute.xlu0 2
    %311 = vperm.xlu0 %310, %v66
    %v312 = vpop.permute.xlu0 %311
    %314 = vset.pattern.permute.xlu0 2
    %315 = vperm.xlu0 %314, %v67
    %v316 = vpop.permute.xlu0 %315
    %318 = vset.pattern.permute.xlu0 2
    %319 = vperm.xlu0 %318, %v68
    %v320 = vpop.permute.xlu0 %319
    %322 = vset.pattern.permute.xlu0 2
    %323 = vperm.xlu0 %322, %v69
    %v324 = vpop.permute.xlu0 %323
    %326 = vset.pattern.permute.xlu0 2
    %327 = vperm.xlu0 %326, %v70
    %v328 = vpop.permute.xlu0 %327
    %v330 = vperm.slane %v71, 2
    %v331 = vmul.f32 %v268, %v330
    %v332 = vmul.f32 %v272, %v330
    %v333 = vmul.f32 %v276, %v330
    %v334 = vmul.f32 %v280, %v330
    %v335 = vmul.f32 %v284, %v330
    %v336 = vmul.f32 %v288, %v330
    %v337 = vmul.f32 %v292, %v330
    %v338 = vmul.f32 %v296, %v330
    %v339 = vmul.f32 %v300, %v330
    %v340 = vmul.f32 %v304, %v330
    %v341 = vmul.f32 %v308, %v330
    %v342 = vmul.f32 %v312, %v330
    %v343 = vmul.f32 %v316, %v330
    %v344 = vmul.f32 %v320, %v330
    %v345 = vmul.f32 %v324, %v330
    %v346 = vmul.f32 %v328, %v330
    %v347 = vadd.f32 %v250, %v331
    %v348 = vadd.f32 %v251, %v332
    %v349 = vadd.f32 %v252, %v333
    %v350 = vadd.f32 %v253, %v334
    %v351 = vadd.f32 %v254, %v335
    %v352 = vadd.f32 %v255, %v336
    %v353 = vadd.f32 %v256, %v337
    %v354 = vadd.f32 %v257, %v338
    %v355 = vadd.f32 %v258, %v339
    %v356 = vadd.f32 %v259, %v340
    %v357 = vadd.f32 %v260, %v341
    %v358 = vadd.f32 %v261, %v342
    %v359 = vadd.f32 %v262, %v343
    %v360 = vadd.f32 %v263, %v344
    %v361 = vadd.f32 %v264, %v345
    %v362 = vadd.f32 %v265, %v346
    %v363 = vld [vmem:[%s2] sm:$0x1]
    %v365 = vperm.slane %v363, 0
    %v367 = vadd.f32 %v347, %v365
    %v368 = vadd.f32 %v348, %v365
    %v369 = vadd.f32 %v349, %v365
    %v370 = vadd.f32 %v350, %v365
    %v371 = vadd.f32 %v351, %v365
    %v372 = vadd.f32 %v352, %v365
    %v373 = vadd.f32 %v353, %v365
    %v374 = vadd.f32 %v354, %v365
    %v375 = vadd.f32 %v355, %v365
    %v376 = vadd.f32 %v356, %v365
    %v377 = vadd.f32 %v357, %v365
    %v378 = vadd.f32 %v358, %v365
    %v379 = vadd.f32 %v359, %v365
    %v380 = vadd.f32 %v360, %v365
    %v381 = vadd.f32 %v361, %v365
    %v382 = vadd.f32 %v362, %v365
    %v383 = vmax.f32 %v367, 0.0
    %v384 = vmax.f32 %v368, 0.0
    %v385 = vmax.f32 %v369, 0.0
    %v386 = vmax.f32 %v370, 0.0
    %v387 = vmax.f32 %v371, 0.0
    %v388 = vmax.f32 %v372, 0.0
    %v389 = vmax.f32 %v373, 0.0
    %v390 = vmax.f32 %v374, 0.0
    %v391 = vmax.f32 %v375, 0.0
    %v392 = vmax.f32 %v376, 0.0
    %v393 = vmax.f32 %v377, 0.0
    %v394 = vmax.f32 %v378, 0.0
    %v395 = vmax.f32 %v379, 0.0
    %v396 = vmax.f32 %v380, 0.0
    %v397 = vmax.f32 %v381, 0.0
    %v398 = vmax.f32 %v382, 0.0
    %v399 = vld [vmem:[%s3] sm:$0xf]
    %v400 = vld [vmem:[%s3 + $0x4] sm:$0xf]
    %v401 = vld [vmem:[%s3 + $0x8] sm:$0xf]
    %v402 = vld [vmem:[%s3 + $0xc] sm:$0xf]
    %v403 = vld [vmem:[%s3 + $0x10] sm:$0xf]
    %v404 = vld [vmem:[%s3 + $0x14] sm:$0xf]
    %v405 = vld [vmem:[%s3 + $0x18] sm:$0xf]
    %v406 = vld [vmem:[%s3 + $0x1c] sm:$0xf]
    %v407 = vpack.c.bf16 %v384, %v383
    %v408 = vpack.c.bf16 %v386, %v385
    %v409 = vpack.c.bf16 %v388, %v387
    %v410 = vpack.c.bf16 %v390, %v389
    %v411 = vpack.c.bf16 %v392, %v391
    %v412 = vpack.c.bf16 %v394, %v393
    %v413 = vpack.c.bf16 %v396, %v395
    %v414 = vpack.c.bf16 %v398, %v397
    %v415 = vld [vmem:[%s4] sm:$0x1]
    %v417 = vperm.slane %v415, 0
    %v427 = vunpack.c.l.b16 %v399
    %v428 = vunpack.c.l.b16 %v400
    %v429 = vunpack.c.l.b16 %v401
    %v430 = vunpack.c.l.b16 %v402
    %v431 = vunpack.c.l.b16 %v403
    %v432 = vunpack.c.l.b16 %v404
    %v433 = vunpack.c.l.b16 %v405
    %v434 = vunpack.c.l.b16 %v406
    %v435 = vpack.c.b16 %v428, %v427
    %v436 = vpack.c.b16 %v430, %v429
    %v437 = vpack.c.b16 %v432, %v431
    %v438 = vpack.c.b16 %v434, %v433
    %vm443 = vcmask 523264
    %v445 = vsel %vm443, %v407, 0
    %v448 = vsel %vm443, %v408, 0
    %v451 = vsel %vm443, %v409, 0
    %v454 = vsel %vm443, %v410, 0
    %v457 = vsel %vm443, %v411, 0
    %v460 = vsel %vm443, %v412, 0
    %v463 = vsel %vm443, %v413, 0
    %v466 = vsel %vm443, %v414, 0
    %468 = vmatpush.bf16.msra.mxu0 0
    %469 = vmatpush.bf16.msra.mxu0 0
    %470 = vmatpush.bf16.msra.mxu0 0
    %471 = vmatpush.bf16.msra.mxu0 0
    %472 = vmatpush.bf16.msra.mxu0 %v438
    %473 = vmatpush.bf16.msra.mxu0 %v437
    %474 = vmatpush.bf16.msra.mxu0 %v436
    %475 = vmatpush.bf16.msra.mxu0 %v435
    %476 = vmatmul.bf16.gmra.mxu0 %v445
    %v477 = vpop.f32.mrf.mxu0
    %v478 = vadd.f32 %v417, %v477
    %v479 = vpop.f32.mrf.mxu0
    %v480 = vadd.f32 %v417, %v479
    %481 = vmatmul.bf16.gmra.mxu0 %v448
    %v482 = vpop.f32.mrf.mxu0
    %v483 = vadd.f32 %v417, %v482
    %v484 = vpop.f32.mrf.mxu0
    %v485 = vadd.f32 %v417, %v484
    %486 = vmatmul.bf16.gmra.mxu0 %v451
    %v487 = vpop.f32.mrf.mxu0
    %v488 = vadd.f32 %v417, %v487
    %v489 = vpop.f32.mrf.mxu0
    %v490 = vadd.f32 %v417, %v489
    %491 = vmatmul.bf16.gmra.mxu0 %v454
    %v492 = vpop.f32.mrf.mxu0
    %v493 = vadd.f32 %v417, %v492
    %v494 = vpop.f32.mrf.mxu0
    %v495 = vadd.f32 %v417, %v494
    %496 = vmatmul.bf16.gmra.mxu0 %v457
    %v497 = vpop.f32.mrf.mxu0
    %v498 = vadd.f32 %v417, %v497
    %v499 = vpop.f32.mrf.mxu0
    %v500 = vadd.f32 %v417, %v499
    %501 = vmatmul.bf16.gmra.mxu0 %v460
    %v502 = vpop.f32.mrf.mxu0
    %v503 = vadd.f32 %v417, %v502
    %v504 = vpop.f32.mrf.mxu0
    %v505 = vadd.f32 %v417, %v504
    %506 = vmatmul.bf16.gmra.mxu0 %v463
    %v507 = vpop.f32.mrf.mxu0
    %v508 = vadd.f32 %v417, %v507
    %v509 = vpop.f32.mrf.mxu0
    %v510 = vadd.f32 %v417, %v509
    %511 = vmatmul.bf16.gmra.mxu0 %v466
    %v512 = vpop.f32.mrf.mxu0
    %v513 = vadd.f32 %v417, %v512
    %v514 = vpop.f32.mrf.mxu0
    %v515 = vadd.f32 %v417, %v514
    %516 = vdwg.mxu0
    %v517 = vmax.f32 %v478, 0.0
    %v518 = vmax.f32 %v480, 0.0
    %v519 = vmax.f32 %v483, 0.0
    %v520 = vmax.f32 %v485, 0.0
    %v521 = vmax.f32 %v488, 0.0
    %v522 = vmax.f32 %v490, 0.0
    %v523 = vmax.f32 %v493, 0.0
    %v524 = vmax.f32 %v495, 0.0
    %v525 = vmax.f32 %v498, 0.0
    %v526 = vmax.f32 %v500, 0.0
    %v527 = vmax.f32 %v503, 0.0
    %v528 = vmax.f32 %v505, 0.0
    %v529 = vmax.f32 %v508, 0.0
    %v530 = vmax.f32 %v510, 0.0
    %v531 = vmax.f32 %v513, 0.0
    %v532 = vmax.f32 %v515, 0.0
    %v533 = vld [vmem:[%s5] sm:$0xf]
    %v534 = vld [vmem:[%s5 + $0x4] sm:$0xf]
    %v535 = vld [vmem:[%s5 + $0x8] sm:$0xf]
    %v536 = vld [vmem:[%s5 + $0xc] sm:$0xf]
    %v537 = vld [vmem:[%s5 + $0x10] sm:$0xf]
    %v538 = vld [vmem:[%s5 + $0x14] sm:$0xf]
    %v539 = vld [vmem:[%s5 + $0x18] sm:$0xf]
    %v540 = vld [vmem:[%s5 + $0x1c] sm:$0xf]
    %v541 = vpack.c.bf16 %v518, %v517
    %v542 = vpack.c.bf16 %v520, %v519
    %v543 = vpack.c.bf16 %v522, %v521
    %v544 = vpack.c.bf16 %v524, %v523
    %v545 = vpack.c.bf16 %v526, %v525
    %v546 = vpack.c.bf16 %v528, %v527
    %v547 = vpack.c.bf16 %v530, %v529
    %v548 = vpack.c.bf16 %v532, %v531
    %v549 = vld [vmem:[%s6] sm:$0x1]
    %v551 = vperm.slane %v549, 0
    %v561 = vunpack.c.l.b16 %v533
    %v562 = vunpack.c.l.b16 %v534
    %v563 = vunpack.c.l.b16 %v535
    %v564 = vunpack.c.l.b16 %v536
    %v565 = vunpack.c.l.b16 %v537
    %v566 = vunpack.c.l.b16 %v538
    %v567 = vunpack.c.l.b16 %v539
    %v568 = vunpack.c.l.b16 %v540
    %v569 = vpack.c.b16 %v562, %v561
    %v570 = vpack.c.b16 %v564, %v563
    %v571 = vpack.c.b16 %v566, %v565
    %v572 = vpack.c.b16 %v568, %v567
    %v578 = vsel %vm443, %v541, 0
    %v581 = vsel %vm443, %v542, 0
    %v584 = vsel %vm443, %v543, 0
    %v587 = vsel %vm443, %v544, 0
    %v590 = vsel %vm443, %v545, 0
    %v593 = vsel %vm443, %v546, 0
    %v596 = vsel %vm443, %v547, 0
    %v599 = vsel %vm443, %v548, 0
    %601 = vmatpush.bf16.msra.mxu0 0
    %602 = vmatpush.bf16.msra.mxu0 0
    %603 = vmatpush.bf16.msra.mxu0 0
    %604 = vmatpush.bf16.msra.mxu0 0
    %605 = vmatpush.bf16.msra.mxu0 %v572
    %606 = vmatpush.bf16.msra.mxu0 %v571
    %607 = vmatpush.bf16.msra.mxu0 %v570
    %608 = vmatpush.bf16.msra.mxu0 %v569
    %609 = vmatmul.bf16.gmra.mxu0 %v578
    %v610 = vpop.f32.mrf.mxu0
    %v611 = vadd.f32 %v551, %v610
    %v612 = vpop.f32.mrf.mxu0
    %v613 = vadd.f32 %v551, %v612
    %614 = vmatmul.bf16.gmra.mxu0 %v581
    %v615 = vpop.f32.mrf.mxu0
    %v616 = vadd.f32 %v551, %v615
    %v617 = vpop.f32.mrf.mxu0
    %v618 = vadd.f32 %v551, %v617
    %619 = vmatmul.bf16.gmra.mxu0 %v584
    %v620 = vpop.f32.mrf.mxu0
    %v621 = vadd.f32 %v551, %v620
    %v622 = vpop.f32.mrf.mxu0
    %v623 = vadd.f32 %v551, %v622
    %624 = vmatmul.bf16.gmra.mxu0 %v587
    %v625 = vpop.f32.mrf.mxu0
    %v626 = vadd.f32 %v551, %v625
    %v627 = vpop.f32.mrf.mxu0
    %v628 = vadd.f32 %v551, %v627
    %629 = vmatmul.bf16.gmra.mxu0 %v590
    %v630 = vpop.f32.mrf.mxu0
    %v631 = vadd.f32 %v551, %v630
    %v632 = vpop.f32.mrf.mxu0
    %v633 = vadd.f32 %v551, %v632
    %634 = vmatmul.bf16.gmra.mxu0 %v593
    %v635 = vpop.f32.mrf.mxu0
    %v636 = vadd.f32 %v551, %v635
    %v637 = vpop.f32.mrf.mxu0
    %v638 = vadd.f32 %v551, %v637
    %639 = vmatmul.bf16.gmra.mxu0 %v596
    %v640 = vpop.f32.mrf.mxu0
    %v641 = vadd.f32 %v551, %v640
    %v642 = vpop.f32.mrf.mxu0
    %v643 = vadd.f32 %v551, %v642
    %644 = vmatmul.bf16.gmra.mxu0 %v599
    %v645 = vpop.f32.mrf.mxu0
    %v646 = vadd.f32 %v551, %v645
    %v647 = vpop.f32.mrf.mxu0
    %v648 = vadd.f32 %v551, %v647
    %649 = vdwg.mxu0
    %v650 = vmax.f32 %v611, 0.0
    %v651 = vmax.f32 %v613, 0.0
    %v652 = vmax.f32 %v616, 0.0
    %v653 = vmax.f32 %v618, 0.0
    %v654 = vmax.f32 %v621, 0.0
    %v655 = vmax.f32 %v623, 0.0
    %v656 = vmax.f32 %v626, 0.0
    %v657 = vmax.f32 %v628, 0.0
    %v658 = vmax.f32 %v631, 0.0
    %v659 = vmax.f32 %v633, 0.0
    %v660 = vmax.f32 %v636, 0.0
    %v661 = vmax.f32 %v638, 0.0
    %v662 = vmax.f32 %v641, 0.0
    %v663 = vmax.f32 %v643, 0.0
    %v664 = vmax.f32 %v646, 0.0
    %v665 = vmax.f32 %v648, 0.0
    %v666 = vld [vmem:[%s7] sm:$0xf]
    %v667 = vld [vmem:[%s7 + $0x4] sm:$0xf]
    %v668 = vld [vmem:[%s7 + $0x8] sm:$0xf]
    %v669 = vld [vmem:[%s7 + $0xc] sm:$0xf]
    %v670 = vld [vmem:[%s7 + $0x10] sm:$0xf]
    %v671 = vld [vmem:[%s7 + $0x14] sm:$0xf]
    %v672 = vld [vmem:[%s7 + $0x18] sm:$0xf]
    %v673 = vld [vmem:[%s7 + $0x1c] sm:$0xf]
    %v674 = vpack.c.bf16 %v651, %v650
    %v675 = vpack.c.bf16 %v653, %v652
    %v676 = vpack.c.bf16 %v655, %v654
    %v677 = vpack.c.bf16 %v657, %v656
    %v678 = vpack.c.bf16 %v659, %v658
    %v679 = vpack.c.bf16 %v661, %v660
    %v680 = vpack.c.bf16 %v663, %v662
    %v681 = vpack.c.bf16 %v665, %v664
    %v682 = vld [vmem:[%s8] sm:$0x1]
    %v684 = vperm.slane %v682, 0
    %v694 = vunpack.c.l.b16 %v666
    %v695 = vunpack.c.l.b16 %v667
    %v696 = vunpack.c.l.b16 %v668
    %v697 = vunpack.c.l.b16 %v669
    %v698 = vunpack.c.l.b16 %v670
    %v699 = vunpack.c.l.b16 %v671
    %v700 = vunpack.c.l.b16 %v672
    %v701 = vunpack.c.l.b16 %v673
    %v702 = vpack.c.b16 %v695, %v694
    %v703 = vpack.c.b16 %v697, %v696
    %v704 = vpack.c.b16 %v699, %v698
    %v705 = vpack.c.b16 %v701, %v700
    %v711 = vsel %vm443, %v674, 0
    %v714 = vsel %vm443, %v675, 0
    %v717 = vsel %vm443, %v676, 0
    %v720 = vsel %vm443, %v677, 0
    %v723 = vsel %vm443, %v678, 0
    %v726 = vsel %vm443, %v679, 0
    %v729 = vsel %vm443, %v680, 0
    %v732 = vsel %vm443, %v681, 0
    %734 = vmatpush.bf16.msra.mxu0 0
    %735 = vmatpush.bf16.msra.mxu0 0
    %736 = vmatpush.bf16.msra.mxu0 0
    %737 = vmatpush.bf16.msra.mxu0 0
    %738 = vmatpush.bf16.msra.mxu0 %v705
    %739 = vmatpush.bf16.msra.mxu0 %v704
    %740 = vmatpush.bf16.msra.mxu0 %v703
    %741 = vmatpush.bf16.msra.mxu0 %v702
    %742 = vmatmul.bf16.gmra.mxu0 %v711
    %v743 = vpop.f32.mrf.mxu0
    %v744 = vadd.f32 %v684, %v743
    %v745 = vpop.f32.mrf.mxu0
    %v746 = vadd.f32 %v684, %v745
    %747 = vmatmul.bf16.gmra.mxu0 %v714
    %v748 = vpop.f32.mrf.mxu0
    %v749 = vadd.f32 %v684, %v748
    %v750 = vpop.f32.mrf.mxu0
    %v751 = vadd.f32 %v684, %v750
    %752 = vmatmul.bf16.gmra.mxu0 %v717
    %v753 = vpop.f32.mrf.mxu0
    %v754 = vadd.f32 %v684, %v753
    %v755 = vpop.f32.mrf.mxu0
    %v756 = vadd.f32 %v684, %v755
    %757 = vmatmul.bf16.gmra.mxu0 %v720
    %v758 = vpop.f32.mrf.mxu0
    %v759 = vadd.f32 %v684, %v758
    %v760 = vpop.f32.mrf.mxu0
    %v761 = vadd.f32 %v684, %v760
    %762 = vmatmul.bf16.gmra.mxu0 %v723
    %v763 = vpop.f32.mrf.mxu0
    %v764 = vadd.f32 %v684, %v763
    %v765 = vpop.f32.mrf.mxu0
    %v766 = vadd.f32 %v684, %v765
    %767 = vmatmul.bf16.gmra.mxu0 %v726
    %v768 = vpop.f32.mrf.mxu0
    %v769 = vadd.f32 %v684, %v768
    %v770 = vpop.f32.mrf.mxu0
    %v771 = vadd.f32 %v684, %v770
    %772 = vmatmul.bf16.gmra.mxu0 %v729
    %v773 = vpop.f32.mrf.mxu0
    %v774 = vadd.f32 %v684, %v773
    %v775 = vpop.f32.mrf.mxu0
    %v776 = vadd.f32 %v684, %v775
    %777 = vmatmul.bf16.gmra.mxu0 %v732
    %v778 = vpop.f32.mrf.mxu0
    %v779 = vadd.f32 %v684, %v778
    %v780 = vpop.f32.mrf.mxu0
    %v781 = vadd.f32 %v684, %v780
    %782 = vdwg.mxu0
    %v783 = vmax.f32 %v744, 0.0
    %v784 = vmax.f32 %v746, 0.0
    %v785 = vmax.f32 %v749, 0.0
    %v786 = vmax.f32 %v751, 0.0
    %v787 = vmax.f32 %v754, 0.0
    %v788 = vmax.f32 %v756, 0.0
    %v789 = vmax.f32 %v759, 0.0
    %v790 = vmax.f32 %v761, 0.0
    %v791 = vmax.f32 %v764, 0.0
    %v792 = vmax.f32 %v766, 0.0
    %v793 = vmax.f32 %v769, 0.0
    %v794 = vmax.f32 %v771, 0.0
    %v795 = vmax.f32 %v774, 0.0
    %v796 = vmax.f32 %v776, 0.0
    %v797 = vmax.f32 %v779, 0.0
    %v798 = vmax.f32 %v781, 0.0
    %v799 = vmax.f32 %v783, %v785
    %v800 = vmax.f32 %v784, %v786
    %v801 = vmax.f32 %v799, %v787
    %v802 = vmax.f32 %v800, %v788
    %v803 = vmax.f32 %v801, %v789
    %v804 = vmax.f32 %v802, %v790
    %v805 = vmax.f32 %v803, %v804
    %v806 = vrot.slane %v805, 4
    %v807 = vmax.f32 %v805, %v806
    %v808 = vrot.slane %v807, 2
    %v809 = vmax.f32 %v807, %v808
    %v810 = vrot.slane %v809, 1
    %v811 = vmax.f32 %v809, %v810
    %v812 = vmax.f32 %v791, %v793
    %v813 = vmax.f32 %v792, %v794
    %v814 = vmax.f32 %v812, %v795
    %v815 = vmax.f32 %v813, %v796
    %v816 = vmax.f32 %v814, %v797
    %v817 = vmax.f32 %v815, %v798
    %v818 = vmax.f32 %v816, %v817
    %v819 = vrot.slane %v818, 4
    %v820 = vmax.f32 %v818, %v819
    %v821 = vrot.slane %v820, 2
    %v822 = vmax.f32 %v820, %v821
    %v823 = vrot.slane %v822, 1
    %v824 = vmax.f32 %v822, %v823
    %vm827 = vcmask 1041409
    %v828 = vsel %vm827, %v824, %v811
    %830 = vst [vmem:[#allocation2] sm:$0x3] %v828
    %v831 = vld [vmem:[%s9] sm:$0xf]
    %v832 = vld [vmem:[%s9 + $0x4] sm:$0xf]
    %v833 = vld [vmem:[%s9 + $0x8] sm:$0xf]
    %v834 = vld [vmem:[%s9 + $0xc] sm:$0xf]
    %v835 = vld [vmem:[%s9 + $0x10] sm:$0xf]
    %v836 = vld [vmem:[%s9 + $0x14] sm:$0xf]
    %v837 = vld [vmem:[%s9 + $0x18] sm:$0xf]
    %v838 = vld [vmem:[%s9 + $0x1c] sm:$0xf]
    %v839 = vld [vmem:[%s9 + $0x20] sm:$0xf]
    %v840 = vld [vmem:[%s9 + $0x24] sm:$0xf]
    %v841 = vld [vmem:[%s9 + $0x28] sm:$0xf]
    %v842 = vld [vmem:[%s9 + $0x2c] sm:$0xf]
    %v843 = vld [vmem:[%s9 + $0x30] sm:$0xf]
    %v844 = vld [vmem:[%s9 + $0x34] sm:$0xf]
    %v845 = vld [vmem:[%s9 + $0x38] sm:$0xf]
    %v846 = vld [vmem:[%s9 + $0x3c] sm:$0xf]
    %v847 = vpack.c.bf16 %v811, %v811
    %v848 = vpack.c.bf16 %v824, %v824
    %v849 = vld [vmem:[%s10] sm:$0x1]
    %v851 = vperm.slane %v849, 0
    %v855 = vunpack.c.l.b16 %v847
    %v856 = vunpack.c.l.b16 %v848
    %v857 = vsel %vm827, %v856, %v855
    %v858 = vpack.c.b16 %v857, %v857
    %v876 = vunpack.c.l.b16 %v831
    %v877 = vunpack.c.l.b16 %v832
    %v878 = vunpack.c.l.b16 %v833
    %v879 = vunpack.c.l.b16 %v834
    %v880 = vunpack.c.l.b16 %v835
    %v881 = vunpack.c.l.b16 %v836
    %v882 = vunpack.c.l.b16 %v837
    %v883 = vunpack.c.l.b16 %v838
    %v884 = vunpack.c.l.b16 %v839
    %v885 = vunpack.c.l.b16 %v840
    %v886 = vunpack.c.l.b16 %v841
    %v887 = vunpack.c.l.b16 %v842
    %v888 = vunpack.c.l.b16 %v843
    %v889 = vunpack.c.l.b16 %v844
    %v890 = vunpack.c.l.b16 %v845
    %v891 = vunpack.c.l.b16 %v846
    %v892 = vpack.c.b16 %v877, %v876
    %v893 = vpack.c.b16 %v879, %v878
    %v894 = vpack.c.b16 %v881, %v880
    %v895 = vpack.c.b16 %v883, %v882
    %v896 = vpack.c.b16 %v885, %v884
    %v897 = vpack.c.b16 %v887, %v886
    %v898 = vpack.c.b16 %v889, %v888
    %v899 = vpack.c.b16 %v891, %v890
    %908 = vmatpush.bf16.msra.mxu0 %v899
    %909 = vmatpush.bf16.msra.mxu0 %v898
    %910 = vmatpush.bf16.msra.mxu0 %v897
    %911 = vmatpush.bf16.msra.mxu0 %v896
    %912 = vmatpush.bf16.msra.mxu0 %v895
    %913 = vmatpush.bf16.msra.mxu0 %v894
    %914 = vmatpush.bf16.msra.mxu0 %v893
    %915 = vmatpush.bf16.msra.mxu0 %v892
    %916 = vmatmul.bf16.gmra.mxu0 %v858
    %v917 = vpop.f32.mrf.mxu0
    %v918 = vadd.f32 %v851, %v917
    %v919 = vpop.f32.mrf.mxu0
    %920 = vdwg.mxu0
    %v921 = vmax.f32 %v918, 0.0
    %v922 = vld [vmem:[%s11] sm:$0xf]
    %v923 = vld [vmem:[%s11 + $0x4] sm:$0xf]
    %v924 = vld [vmem:[%s11 + $0x8] sm:$0xf]
    %v925 = vld [vmem:[%s11 + $0xc] sm:$0xf]
    %v926 = vpack.c.bf16 %v921, %v921
    %v927 = vld [vmem:[%s12] sm:$0x1]
    %v929 = vperm.slane %v927, 0
    %v935 = vunpack.c.l.b16 %v922
    %v936 = vunpack.c.l.b16 %v923
    %v937 = vunpack.c.l.b16 %v924
    %v938 = vunpack.c.l.b16 %v925
    %v939 = vpack.c.b16 %v936, %v935
    %v940 = vpack.c.b16 %v938, %v937
    %vm943 = vcmask 261120
    %v945 = vsel %vm943, %v926, 0
    %947 = vmatpush.bf16.msra.mxu0 0
    %948 = vmatpush.bf16.msra.mxu0 0
    %949 = vmatpush.bf16.msra.mxu0 0
    %950 = vmatpush.bf16.msra.mxu0 0
    %951 = vmatpush.bf16.msra.mxu0 0
    %952 = vmatpush.bf16.msra.mxu0 0
    %953 = vmatpush.bf16.msra.mxu0 %v940
    %954 = vmatpush.bf16.msra.mxu0 %v939
    %955 = vmatmul.bf16.gmra.mxu0 %v945
    %v956 = vpop.f32.mrf.mxu0
    %v957 = vadd.f32 %v929, %v956
    %v958 = vpop.f32.mrf.mxu0
    %959 = vdwg.mxu0
    %v960 = vmax.f32 %v957, 0.0
    %v961 = vld [vmem:[%s13] sm:$0xff]
    %v962 = vld [vmem:[%s13 + $0x8] sm:$0xff]
    %v963 = vld [vmem:[%s13 + $0x10] sm:$0xff]
    %v964 = vld [vmem:[%s13 + $0x18] sm:$0xff]
    %v965 = vld [vmem:[%s13 + $0x20] sm:$0xff]
    %v966 = vld [vmem:[%s13 + $0x28] sm:$0xff]
    %v967 = vld [vmem:[%s13 + $0x30] sm:$0xff]
    %v968 = vld [vmem:[%s13 + $0x38] sm:$0xff]
    %v969 = vpack.c.bf16 %v960, %v960
    %v970 = vld [vmem:[%s14] sm:$0x3]
    %v972 = vperm.slane %v970, 0
    %v973 = vperm.slane %v970, 1
    %v984 = vunpack.c.l.b16 %v961
    %v985 = vunpack.c.h.b16 %v961
    %v986 = vunpack.c.l.b16 %v962
    %v987 = vunpack.c.h.b16 %v962
    %v988 = vunpack.c.l.b16 %v963
    %v989 = vunpack.c.h.b16 %v963
    %v990 = vunpack.c.l.b16 %v964
    %v991 = vunpack.c.h.b16 %v964
    %v992 = vunpack.c.l.b16 %v965
    %v993 = vunpack.c.h.b16 %v965
    %v994 = vunpack.c.l.b16 %v966
    %v995 = vunpack.c.h.b16 %v966
    %v996 = vunpack.c.l.b16 %v967
    %v997 = vunpack.c.h.b16 %v967
    %v998 = vunpack.c.l.b16 %v968
    %v999 = vunpack.c.h.b16 %v968
    %v1000 = vpack.c.b16 %v986, %v984
    %v1001 = vpack.c.b16 %v987, %v985
    %v1002 = vpack.c.b16 %v990, %v988
    %v1003 = vpack.c.b16 %v991, %v989
    %v1004 = vpack.c.b16 %v994, %v992
    %v1005 = vpack.c.b16 %v995, %v993
    %v1006 = vpack.c.b16 %v998, %v996
    %v1007 = vpack.c.b16 %v999, %v997
    %v1017 = vsel %vm443, %v969, 0
    %1019 = vmatpush.bf16.msra.mxu0 0
    %1020 = vmatpush.bf16.msra.mxu0 0
    %1021 = vmatpush.bf16.msra.mxu0 0
    %1022 = vmatpush.bf16.msra.mxu0 0
    %1023 = vmatpush.bf16.msra.mxu0 %v1006
    %1024 = vmatpush.bf16.msra.mxu0 %v1004
    %1025 = vmatpush.bf16.msra.mxu0 %v1002
    %1026 = vmatpush.bf16.msra.mxu0 %v1000
    %1027 = vmatmul.bf16.gmra.mxu0 %v1017
    %v1028 = vpop.f32.mrf.mxu0
    %v1029 = vadd.f32 %v972, %v1028
    %v1030 = vpop.f32.mrf.mxu0
    %1031 = vdwg.mxu0
    %1032 = vmatpush.bf16.msra.mxu0 0
    %1033 = vmatpush.bf16.msra.mxu0 0
    %1034 = vmatpush.bf16.msra.mxu0 0
    %1035 = vmatpush.bf16.msra.mxu0 0
    %1036 = vmatpush.bf16.msra.mxu0 %v1007
    %1037 = vmatpush.bf16.msra.mxu0 %v1005
    %1038 = vmatpush.bf16.msra.mxu0 %v1003
    %1039 = vmatpush.bf16.msra.mxu0 %v1001
    %1040 = vmatmul.bf16.gmra.mxu0 %v1017
    %v1041 = vpop.f32.mrf.mxu0
    %v1042 = vadd.f32 %v973, %v1041
    %v1043 = vpop.f32.mrf.mxu0
    %1044 = vdwg.mxu0
    %v1047 = vrot.slane %v1042, 6
    %vm1048 = vcmask 1041408
    %v1049 = vsel %vm1048, %v1029, %v1047
    %vm1051 = vcmask 519170
    %vm1052 = vmor %vm1051, %vm1048
    %1053 = vst.msk [vmem:[#allocation4] sm:$0xf] %vm1052, %v1049
    // Predicated region
    $region62: #{tpu_custom_call.1} parent=1 // pred_check
      _
    $region63: #{tpu_custom_call.1} parent=1 // pred_check_branch
      %1055 = sbr.rel (0) target = $region65
    $region64: #{tpu_custom_call.1} parent=1 // pred_region
      %1057 = vsyncadd [#allocation3], 0
      %s1059 = sshll.u32 [#allocation2], 4
      %s1060 = int_to_ptr.vmem [resolvable:$true] %s1059
      %s1061 = sshll.u32 %s15, 4
      %s1062 = int_to_ptr.hbm [resolvable:$true] %s1061
      %1064 = dma.vmem_to_hbm [thread:$0]  %s1060, 32, %s1062, [#allocation3]
    $region65: #{tpu_custom_call.1} parent=1 // pred_fallthru
      _
    // Predicated region
    $region66: #{tpu_custom_call.1} parent=1 // pred_check
      _
    $region67: #{tpu_custom_call.1} parent=1 // pred_check_branch
      %1066 = sbr.rel (0) target = $region69
    $region68: #{tpu_custom_call.1} parent=1 // pred_region
      %1068 = vsyncadd [#allocation5], 0
      %s1070 = sshll.u32 [#allocation4], 4
      %s1071 = int_to_ptr.vmem [resolvable:$true] %s1070
      %s1072 = sshll.u32 %s16, 4
      %s1073 = int_to_ptr.hbm [resolvable:$true] %s1072
      %1075 = dma.vmem_to_hbm [thread:$0]  %s1071, 64, %s1073, [#allocation5]
    $region69: #{tpu_custom_call.1} parent=1 // pred_fallthru
      _
    // Predicated region
    $region70: #{tpu_custom_call.1} parent=1 // pred_check
      _
    $region71: #{tpu_custom_call.1} parent=1 // pred_check_branch
      %1077 = sbr.rel (0) target = $region73
    $region72: #{tpu_custom_call.1} parent=1 // pred_region
      %1079 = dma.done [#allocation3], 32
    $region73: #{tpu_custom_call.1} parent=1 // pred_fallthru
      _
    // Predicated region
    $region74: #{tpu_custom_call.1} parent=1 // pred_check
      _
    $region75: #{tpu_custom_call.1} parent=1 // pred_check_branch
      %1081 = sbr.rel (0) target = $region77
    $region76: #{tpu_custom_call.1} parent=1 // pred_region
      %1083 = dma.done [#allocation5], 64
    $region77: #{tpu_custom_call.1} parent=1 // pred_fallthru
      _
    %1084 = vsyncpa [#allocation3], 1
    %1085 = vsyncpa [#allocation5], 1

</llo_original>
